<compile_context>
chip_gen: v6e
topology: v6e:2x2x1
jax: 0.10.0
libtpu: 0.0.40
codegen_flags: <defaults>
</compile_context>

<pallas_src>
import math

import jax
import jax.numpy as jnp
from jax.experimental import pallas as pl
from jax.experimental.pallas import tpu as pltpu

EPS = 1e-5   # BatchNorm eps


def _round_up(n, m):
    return ((n + m - 1) // m) * m


# ----------------------------------------------------------------------------
# Pallas kernel: relu(X @ W + shift), bf16 operands, f32 accumulate, bf16 store
# ----------------------------------------------------------------------------

def _gcn_fused_kernel(x_ref, w_ref, s_ref, o_ref):
    acc = jnp.dot(x_ref[...], w_ref[...], preferred_element_type=jnp.float32)
    o_ref[...] = jnp.maximum(acc + s_ref[...], 0.0).astype(o_ref.dtype)


def _row_tile(rows, cap=512):
    """Row tile: full rows (rounded to 8) when small, else ~balanced <=cap."""
    if rows <= cap:
        return _round_up(rows, 8)
    nblk = (rows + cap - 1) // cap
    return _round_up((rows + nblk - 1) // nblk, 8)


def _col_tile(cinv_p, coutv_p, budget_bytes=8 * 1024 * 1024):
    """Largest 128-multiple divisor of coutv_p whose W tile fits the budget."""
    cands = [t for t in range(128, coutv_p + 1, 128) if coutv_p % t == 0]
    fit = [t for t in cands if cinv_p * t * 2 <= budget_bytes]
    return max(fit) if fit else min(cands)


def unit_gcn_forward(x, w, shift, *, out_channels):
    """x: (N, Cin, T, V) f32 torch layout -> y: (N, Cout, T, V) bf16."""
    N, Cin, T, V = x.shape
    CinV_p, CoutV_p = w.shape          # pre-padded to multiples of 128
    CinV = Cin * V
    CoutV = out_channels * V
    rows = N * T

    tm = _row_tile(rows)
    rows_p = _round_up(rows, tm)
    tn = _col_tile(CinV_p, CoutV_p)
    n_row, n_col = rows_p // tm, CoutV_p // tn

    # bf16 cast *before* the relayout; (N,Cin,T,V)->(N,T,Cin,V) keeps the lane
    # dim V in place (non-minor transpose). Row/col zero-pads fuse in.
    x2 = jnp.transpose(x.astype(jnp.bfloat16), (0, 2, 1, 3)).reshape(rows, CinV)
    if rows_p != rows or CinV_p != CinV:
        x2 = jnp.pad(x2, ((0, rows_p - rows), (0, CinV_p - CinV)))

    single_w = (n_col == 1)   # W / shift grid-invariant -> single VMEM buffer

    def _const_spec(shape, imap):
        if single_w:
            return pl.BlockSpec(shape, imap, pipeline_mode=pl.Buffered(1))
        return pl.BlockSpec(shape, imap)

    out = pl.pallas_call(
        _gcn_fused_kernel,
        out_shape=jax.ShapeDtypeStruct((rows_p, CoutV_p), jnp.bfloat16),
        grid=(n_row, n_col),
        in_specs=[
            pl.BlockSpec((tm, CinV_p), lambda i, j: (i, 0)),
            _const_spec((CinV_p, tn), lambda i, j: (0, j)),
            _const_spec((1, tn), lambda i, j: (0, j)),
        ],
        out_specs=pl.BlockSpec((tm, tn), lambda i, j: (i, j)),
        compiler_params=pltpu.CompilerParams(
            dimension_semantics=("parallel", "parallel"),
            vmem_limit_bytes=48 * 1024 * 1024),
    )(x2, w, shift)

    # (rows, (c, w)) -> (N, T, Cout, V) -> torch layout (N, Cout, T, V)
    out = out[:rows, :CoutV].reshape(N, T, out_channels, V)
    return jnp.transpose(out, (0, 2, 1, 3))


# ----------------------------------------------------------------------------
# One-time parameter packing (hoisted out of the jitted forward)
# ----------------------------------------------------------------------------

def l2_norm(A):
    # torch.norm(A, 2, dim=1, keepdim=True) + 1e-4 ; column-wise normalization
    return A / (jnp.linalg.norm(A, axis=1, keepdims=True) + 1e-4)


def _bn_fold(gamma, beta, mean, var):
    scale = gamma / jnp.sqrt(var + EPS)
    return scale, beta - mean * scale


def pack_unit_gcn(raw, adaptive=True):
    """Fold conv_d, adjacency einsum, BN and the down branch into (W, shift).

    Row order of W is (i, v) = (in_channel, joint); column order is (c, w) =
    (out_channel, joint).  Both dims zero-padded to multiples of 128.
    """
    if adaptive:
        A = l2_norm(raw['PA'])
    else:
        A = raw['edge_importance'] * raw['A']
    K, V, _ = A.shape
    Wd = raw['conv_d_w'][:, :, 0, 0]                  # (K*Cout, Cin)
    Cout = Wd.shape[0] // K
    Cin = Wd.shape[1]
    Wd_k = Wd.reshape(K, Cout, Cin)
    bd_k = raw['conv_d_b'].reshape(K, Cout)

    bn_scale, bn_shift = _bn_fold(raw['bn_gamma'], raw['bn_beta'],
                                  raw['bn_mean'], raw['bn_var'])

    # GCN branch: W_main[i,v,c,w] = sum_k Wd[k,c,i] * A[k,v,w]   (BN scaled)
    W_main = jnp.einsum('kci,kvw->ivcw', Wd_k, A) * bn_scale[None, None, :, None]
    bias_main = (jnp.einsum('kc,kw->cw', bd_k, A.sum(axis=1)) * bn_scale[:, None]
                 + bn_shift[:, None])                                   # (Cout, V)

    eye_v = jnp.eye(V, dtype=jnp.float32)
    if 'down_w' in raw:                                # Cin != Cout: conv + BN
        dn_scale, dn_shift = _bn_fold(raw['down_bn_gamma'], raw['down_bn_beta'],
                                      raw['down_bn_mean'], raw['down_bn_var'])
        Wdn = raw['down_w'][:, :, 0, 0] * dn_scale[:, None]             # (Cout, Cin)
        W_down = jnp.einsum('ci,vw->ivcw', Wdn, eye_v)
        bias_down = (raw['down_b'] * dn_scale + dn_shift)[:, None]      # (Cout, 1)
    else:                                              # identity residual
        W_down = jnp.einsum('ic,vw->ivcw', jnp.eye(Cin, dtype=jnp.float32), eye_v)
        bias_down = jnp.zeros((Cout, 1), jnp.float32)

    CinV, CoutV = Cin * V, Cout * V
    CinV_p = _round_up(CinV, 128)
    CoutV_p = _round_up(CoutV, 128)

    W_total = (W_main + W_down).reshape(CinV, CoutV)
    shift = (bias_main + bias_down).reshape(1, CoutV)

    # zero-pad contraction (rows) and output (cols) dims to 128 multiples
    W_pad = jnp.zeros((CinV_p, CoutV_p), jnp.float32).at[:CinV, :CoutV].set(W_total)
    s_pad = jnp.zeros((1, CoutV_p), jnp.float32).at[:, :CoutV].set(shift)

    # Note: residual identity (1.0) + ~1e-6 main weights are stored together in
    # bf16; the lost main-branch contribution is O(1e-6) absolute — negligible.
    return {'w': W_pad.astype(jnp.bfloat16),
            'shift': s_pad.astype(jnp.float32),
            'cout': Cout}


# ----------------------------------------------------------------------------
# Deterministic parameter init (mirrors the torch __init__)
# ----------------------------------------------------------------------------

def init_unit_gcn_raw(key, in_channels, out_channels, A_init, virtual_num=5,
                      adaptive=True):
    K = A_init.shape[0]
    k_hyper, k_conv, k_down = jax.random.split(key, 3)
    # conv_branch_init(conv_d, num_subset): std = sqrt(2 / (n * k1 * k2 * branches))
    std_d = math.sqrt(2.0 / (K * out_channels * in_channels * 1 * K))
    raw = {
        # TODO(synk): hyper_joint is declared by the reference module but never
        # used in its forward(); kept only for parameter-shape fidelity.
        'hyper_joint': jax.random.normal(
            k_hyper, (in_channels, 1, virtual_num), jnp.float32),
        'conv_d_w': (std_d * jax.random.normal(
            k_conv, (K * out_channels, in_channels, 1, 1))).astype(jnp.float32),
        'conv_d_b': jnp.zeros((K * out_channels,), jnp.float32),
        'bn_gamma': jnp.full((out_channels,), 1e-6, jnp.float32),  # bn_init(bn,1e-6)
        'bn_beta': jnp.zeros((out_channels,), jnp.float32),
        'bn_mean': jnp.zeros((out_channels,), jnp.float32),
        'bn_var': jnp.ones((out_channels,), jnp.float32),
    }
    if adaptive:
        raw['PA'] = A_init.astype(jnp.float32)
    else:
        raw['A'] = A_init.astype(jnp.float32)
        raw['edge_importance'] = jnp.ones_like(A_init, dtype=jnp.float32)
    if in_channels != out_channels:
        # conv_init: kaiming_normal fan_out -> std = sqrt(2 / (Cout*kH*kW))
        raw['down_w'] = (math.sqrt(2.0 / out_channels) * jax.random.normal(
            k_down, (out_channels, in_channels, 1, 1))).astype(jnp.float32)
        raw['down_b'] = jnp.zeros((out_channels,), jnp.float32)
        raw['down_bn_gamma'] = jnp.ones((out_channels,), jnp.float32)
        raw['down_bn_beta'] = jnp.zeros((out_channels,), jnp.float32)
        raw['down_bn_mean'] = jnp.zeros((out_channels,), jnp.float32)
        raw['down_bn_var'] = jnp.ones((out_channels,), jnp.float32)
    return raw


# ----------------------------------------------------------------------------
# Pure-JAX f32 reference (follows the torch forward op-by-op) for verification
# ----------------------------------------------------------------------------

def unit_gcn_reference(x, raw, adaptive=True):
    if adaptive:
        A = l2_norm(raw['PA'])
    else:
        A = raw['edge_importance'] * raw['A']
    K, V, _ = A.shape
    Wd = raw['conv_d_w'][:, :, 0, 0]
    Cout = Wd.shape[0] // K
    N, Cin, T, _ = x.shape

    x1 = jnp.einsum('oi,nitv->notv', Wd, x) + raw['conv_d_b'][None, :, None, None]
    x1 = x1.reshape(N, K, Cout, T, V)
    x1 = jnp.einsum('nkctv,kvw->nctw', x1, A)
    scale, shift = _bn_fold(raw['bn_gamma'], raw['bn_beta'],
                            raw['bn_mean'], raw['bn_var'])
    x1 = x1 * scale[None, :, None, None] + shift[None, :, None, None]

    if 'down_w' in raw:
        d = (jnp.einsum('oi,nitv->notv', raw['down_w'][:, :, 0, 0], x)
             + raw['down_b'][None, :, None, None])
        dsc, dsh = _bn_fold(raw['down_bn_gamma'], raw['down_bn_beta'],
                            raw['down_bn_mean'], raw['down_bn_var'])
        d = d * dsc[None, :, None, None] + dsh[None, :, None, None]
    else:
        d = x
    return jnp.maximum(x1 + d, 0.0)


def _check(name, got, want, rtol=3e-2, atol=2e-3):
    got = got.astype(jnp.float32)
    err = float(jnp.max(jnp.abs(got - want)))
    tol = rtol * float(jnp.max(jnp.abs(want))) + atol
    assert err <= tol, f"{name}: max abs err {err} > tol {tol}"


# ----------------------------------------------------------------------------

if __name__ == "__main__":
    key = jax.random.PRNGKey(0)
    kx1, kx2, kp1, kp2 = jax.random.split(key, 4)

    N, T, V, K = 2, 16, 25, 3          # batch, frames, joints, graph subsets

    # Deterministic stand-in for the skeleton adjacency (K, V, V)
    eye = jnp.eye(V, dtype=jnp.float32)
    ring = jnp.roll(eye, 1, axis=1)
    A_init = jnp.stack([eye, ring, ring.T], axis=0)

    fwd = jax.jit(unit_gcn_forward, static_argnames=("out_channels",))

    # --- case 1: Cin != Cout  (conv1x1 + BN down branch) ---------------------
    Cin, Cout = 3, 64
    x1 = jax.random.normal(kx1, (N, Cin, T, V), dtype=jnp.float32)
    raw1 = init_unit_gcn_raw(kp1, Cin, Cout, A_init)
    packed1 = pack_unit_gcn(raw1)          # one-time packing (bf16 weights)
    y1 = fwd(x1, packed1['w'], packed1['shift'], out_channels=packed1['cout'])
    jax.block_until_ready(y1)
    assert y1.shape == (N, Cout, T, V)
    _check("cin!=cout", y1, unit_gcn_reference(x1, raw1))

    # --- case 2: Cin == Cout  (identity down branch) -------------------------
    Cin = Cout = 64
    x2 = jax.random.normal(kx2, (N, Cin, T, V), dtype=jnp.float32)
    raw2 = init_unit_gcn_raw(kp2, Cin, Cout, A_init)
    packed2 = pack_unit_gcn(raw2)
    y2 = fwd(x2, packed2['w'], packed2['shift'], out_channels=packed2['cout'])
    jax.block_until_ready(y2)
    assert y2.shape == (N, Cout, T, V)
    _check("cin==cout", y2, unit_gcn_reference(x2, raw2))

    print("KERNEL_OK")
</pallas_src>

<mosaic_0001>
module attributes {stable_mosaic.version = 11 : i64} {
  func.func @_gcn_fused_kernel(%arg0: i32, %arg1: i32, %arg2: memref<32x128xbf16, #tpu.memory_space<vmem>>, %arg3: memref<128x1664xbf16, #tpu.memory_space<vmem>>, %arg4: memref<1x1664xf32, #tpu.memory_space<vmem>>, %arg5: memref<32x1664xbf16, #tpu.memory_space<vmem>>) attributes {dimension_semantics = [#tpu.dimension_semantics<parallel>, #tpu.dimension_semantics<parallel>], iteration_bounds = array<i64: 1, 1>, scalar_prefetch = 0 : i64, scratch_operands = 0 : i64, tpu.core_type = #tpu.core_type<tc>, window_params = [{transform_indices = @transform_0, window_bounds = array<i64: 32, 128>}, {pipeline_mode = #tpu.pipeline_mode<synchronous>, transform_indices = @transform_1, window_bounds = array<i64: 128, 1664>}, {pipeline_mode = #tpu.pipeline_mode<synchronous>, transform_indices = @transform_2, window_bounds = array<i64: 1, 1664>}, {transform_indices = @transform_3, window_bounds = array<i64: 32, 1664>}]} {
    %c0 = arith.constant 0 : index
    %c0_0 = arith.constant 0 : index
    %0 = vector.load %arg2[%c0, %c0_0] : memref<32x128xbf16, #tpu.memory_space<vmem>>, vector<32x128xbf16>
    %c0_1 = arith.constant 0 : index
    %c0_2 = arith.constant 0 : index
    %1 = vector.load %arg3[%c0_1, %c0_2] : memref<128x1664xbf16, #tpu.memory_space<vmem>>, vector<128x1664xbf16>
    %cst = arith.constant dense<0.000000e+00> : vector<32x1664xf32>
    %2 = tpu.matmul %0, %1, %cst {dimension_numbers = #tpu.dot_dimension_numbers<[1], [0], [0], [1], [0, 0, 1, 1], [], []>} : vector<32x128xbf16>, vector<128x1664xbf16>, vector<32x1664xf32> -> vector<32x1664xf32>
    %c0_3 = arith.constant 0 : index
    %c0_4 = arith.constant 0 : index
    %3 = vector.load %arg4[%c0_3, %c0_4] : memref<1x1664xf32, #tpu.memory_space<vmem>>, vector<1x1664xf32>
    %4 = vector.broadcast %3 : vector<1x1664xf32> to vector<32x1664xf32>
    %5 = arith.addf %2, %4 : vector<32x1664xf32>
    %cst_5 = arith.constant 0.000000e+00 : f32
    %6 = vector.broadcast %cst_5 : f32 to vector<32x1664xf32>
    %7 = arith.maximumf %5, %6 : vector<32x1664xf32>
    %8 = arith.truncf %7 : vector<32x1664xf32> to vector<32x1664xbf16>
    %c0_6 = arith.constant 0 : index
    %c0_7 = arith.constant 0 : index
    %9 = vector.load %arg5[%c0_6, %c0_7] : memref<32x1664xbf16, #tpu.memory_space<vmem>>, vector<32x1664xbf16>
    tpu.vector_store %arg5[%c0_6, %c0_7], %8 {strides = array<i32>} : memref<32x1664xbf16, #tpu.memory_space<vmem>>, vector<32x1664xbf16>,
    return
  }
  func.func @transform_0(%arg0: i32, %arg1: i32) -> (i32, i32) {
    %c0_i32 = arith.constant 0 : i32
    %c0_i32_0 = arith.constant 0 : i32
    return %arg0, %c0_i32 : i32, i32
  }
  func.func @transform_1(%arg0: i32, %arg1: i32) -> (i32, i32) {
    %c0_i32 = arith.constant 0 : i32
    %c0_i32_0 = arith.constant 0 : i32
    return %c0_i32, %arg1 : i32, i32
  }
  func.func @transform_2(%arg0: i32, %arg1: i32) -> (i32, i32) {
    %c0_i32 = arith.constant 0 : i32
    %c0_i32_0 = arith.constant 0 : i32
    return %c0_i32, %arg1 : i32, i32
  }
  func.func @transform_3(%arg0: i32, %arg1: i32) -> (i32, i32) {
    %c0_i32 = arith.constant 0 : i32
    return %arg0, %arg1 : i32, i32
  }
}

</mosaic_0001>

<llo_original>
// kernel: unit_gcn_forward.1
$region0: #{unit_gcn_forward.1}
  #allocation0 [shape = 'u32[]', space=smem, size = 0x4, offset = 0x4, fixed_abs, tag = 'smem constant byte address 0x4 - core index']
  #allocation1 [shape = 'u32[144,128]{1,0:T(1,128)}', space=vmem, size = 0x12000, scoped, tag = 'internal scratch']
  %s0 = inlined_call_operand.vmem [shape: bf16[32,128], index: 0, kind: input, shape index: {}]
  %s1 = inlined_call_operand.hbm [shape: bf16[128,1664], index: 1, kind: input, shape index: {}]
  %s2 = inlined_call_operand.vmem [shape: f32[1,1664], index: 2, kind: input, shape index: {}]
  %s3 = inlined_call_operand.vmem [shape: bf16[32,1664], index: 3, kind: output, shape index: {}]
  %s4 = sld [smem:[#allocation0]]
  $region26: #{unit_gcn_forward.1} parent=0
    _
  %s6 = ssub.s32 1, %s4
  %s7 = scalar_select 0, %s6, %s4
  $region1: #{unit_gcn_forward.1} parent=0
    #allocation2 [shape = 'u8[425984]{0}', space=vmem, size = 0x68000, scoped, tag = 'input window, operand 1, single buffered']
    #allocation3 [shape = 's32[1]{0}', space=sflag, size = 0x4, scoped, tag = 'scoped memory for unit_gcn_forward.1']
    %8 = vsyncpa [#allocation3], 0
    // Predicated region
    $region2: #{unit_gcn_forward.1} parent=1 // pred_check
      _
    $region3: #{unit_gcn_forward.1} parent=1 // pred_check_branch
      %10 = sbr.rel (0) target = $region5
    $region4: #{unit_gcn_forward.1} parent=1 // pred_region
      _
    $region5: #{unit_gcn_forward.1} parent=1 // pred_fallthru
      _
    // Predicated region
    $region6: #{unit_gcn_forward.1} parent=1 // pred_check
      _
    $region7: #{unit_gcn_forward.1} parent=1 // pred_check_branch
      %12 = sbr.rel (0) target = $region9
    $region8: #{unit_gcn_forward.1} parent=1 // pred_region
      %s14 = ssub.s32 13312, 13312
      %15 = vsyncadd [#allocation3], %s14
      %s16 = sshll.u32 [#allocation2], 4
      %s17 = int_to_ptr.vmem [resolvable:$true] %s16
      %22 = dma.hbm_to_vmem [thread:$0]  %s1, 13312, %s17, [#allocation3], 832, 832, 52
    $region9: #{unit_gcn_forward.1} parent=1 // pred_fallthru
      _
    // Predicated region
    $region10: #{unit_gcn_forward.1} parent=1 // pred_check
      _
    $region11: #{unit_gcn_forward.1} parent=1 // pred_check_branch
      %24 = sbr.rel (0) target = $region13
    $region12: #{unit_gcn_forward.1} parent=1 // pred_region
      _
    $region13: #{unit_gcn_forward.1} parent=1 // pred_fallthru
      _
    // Predicated region
    $region14: #{unit_gcn_forward.1} parent=1 // pred_check
      _
    $region15: #{unit_gcn_forward.1} parent=1 // pred_check_branch
      %26 = sbr.rel (0) target = $region17
    $region16: #{unit_gcn_forward.1} parent=1 // pred_region
      %27 = dma.done [#allocation3], 13312
    $region17: #{unit_gcn_forward.1} parent=1 // pred_fallthru
      _
    %v29 = vld [vmem:[%s0] sm:$0xf]
    %v30 = vld [vmem:[%s0 + $0x4] sm:$0xf]
    %v31 = vld [vmem:[%s0 + $0x8] sm:$0xf]
    %v32 = vld [vmem:[%s0 + $0xc] sm:$0xf]
    %v33 = vld [vmem:[#allocation2] sm:$0xff]
    %v34 = vld [vmem:[#allocation2 + $0x8] sm:$0xff]
    %v35 = vld [vmem:[#allocation2 + $0x10] sm:$0xff]
    %v36 = vld [vmem:[#allocation2 + $0x18] sm:$0xff]
    %v37 = vld [vmem:[#allocation2 + $0x20] sm:$0xff]
    %v38 = vld [vmem:[#allocation2 + $0x28] sm:$0xff]
    %v39 = vld [vmem:[#allocation2 + $0x30] sm:$0xf]
    %v40 = vld [vmem:[#allocation2 + $0x34] sm:$0xff]
    %v41 = vld [vmem:[#allocation2 + $0x3c] sm:$0xff]
    %v42 = vld [vmem:[#allocation2 + $0x44] sm:$0xff]
    %v43 = vld [vmem:[#allocation2 + $0x4c] sm:$0xff]
    %v44 = vld [vmem:[#allocation2 + $0x54] sm:$0xff]
    %v45 = vld [vmem:[#allocation2 + $0x5c] sm:$0xff]
    %v46 = vld [vmem:[#allocation2 + $0x64] sm:$0xf]
    %v47 = vld [vmem:[#allocation2 + $0x68] sm:$0xff]
    %v48 = vld [vmem:[#allocation2 + $0x70] sm:$0xff]
    %v49 = vld [vmem:[#allocation2 + $0x78] sm:$0xff]
    %v50 = vld [vmem:[#allocation2 + $0x80] sm:$0xff]
    %v51 = vld [vmem:[#allocation2 + $0x88] sm:$0xff]
    %v52 = vld [vmem:[#allocation2 + $0x90] sm:$0xff]
    %v53 = vld [vmem:[#allocation2 + $0x98] sm:$0xf]
    %v54 = vld [vmem:[#allocation2 + $0x9c] sm:$0xff]
    %v55 = vld [vmem:[#allocation2 + $0xa4] sm:$0xff]
    %v56 = vld [vmem:[#allocation2 + $0xac] sm:$0xff]
    %v57 = vld [vmem:[#allocation2 + $0xb4] sm:$0xff]
    %v58 = vld [vmem:[#allocation2 + $0xbc] sm:$0xff]
    %v59 = vld [vmem:[#allocation2 + $0xc4] sm:$0xff]
    %v60 = vld [vmem:[#allocation2 + $0xcc] sm:$0xf]
    %v61 = vld [vmem:[#allocation2 + $0xd0] sm:$0xff]
    %v62 = vld [vmem:[#allocation2 + $0xd8] sm:$0xff]
    %v63 = vld [vmem:[#allocation2 + $0xe0] sm:$0xff]
    %v64 = vld [vmem:[#allocation2 + $0xe8] sm:$0xff]
    %v65 = vld [vmem:[#allocation2 + $0xf0] sm:$0xff]
    %v66 = vld [vmem:[#allocation2 + $0xf8] sm:$0xff]
    %v67 = vld [vmem:[#allocation2 + $0x100] sm:$0xf]
    %v68 = vld [vmem:[#allocation2 + $0x104] sm:$0xff]
    %v69 = vld [vmem:[#allocation2 + $0x10c] sm:$0xff]
    %v70 = vld [vmem:[#allocation2 + $0x114] sm:$0xff]
    %v71 = vld [vmem:[#allocation2 + $0x11c] sm:$0xff]
    %v72 = vld [vmem:[#allocation2 + $0x124] sm:$0xff]
    %v73 = vld [vmem:[#allocation2 + $0x12c] sm:$0xff]
    %v74 = vld [vmem:[#allocation2 + $0x134] sm:$0xf]
    %v75 = vld [vmem:[#allocation2 + $0x138] sm:$0xff]
    %v76 = vld [vmem:[#allocation2 + $0x140] sm:$0xff]
    %v77 = vld [vmem:[#allocation2 + $0x148] sm:$0xff]
    %v78 = vld [vmem:[#allocation2 + $0x150] sm:$0xff]
    %v79 = vld [vmem:[#allocation2 + $0x158] sm:$0xff]
    %v80 = vld [vmem:[#allocation2 + $0x160] sm:$0xff]
    %v81 = vld [vmem:[#allocation2 + $0x168] sm:$0xf]
    %v82 = vld [vmem:[#allocation2 + $0x16c] sm:$0xff]
    %v83 = vld [vmem:[#allocation2 + $0x174] sm:$0xff]
    %v84 = vld [vmem:[#allocation2 + $0x17c] sm:$0xff]
    %v85 = vld [vmem:[#allocation2 + $0x184] sm:$0xff]
    %v86 = vld [vmem:[#allocation2 + $0x18c] sm:$0xff]
    %v87 = vld [vmem:[#allocation2 + $0x194] sm:$0xff]
    %v88 = vld [vmem:[#allocation2 + $0x19c] sm:$0xf]
    %v89 = vld [vmem:[#allocation2 + $0x1a0] sm:$0xff]
    %v90 = vld [vmem:[#allocation2 + $0x1a8] sm:$0xff]
    %v91 = vld [vmem:[#allocation2 + $0x1b0] sm:$0xff]
    %v92 = vld [vmem:[#allocation2 + $0x1b8] sm:$0xff]
    %v93 = vld [vmem:[#allocation2 + $0x1c0] sm:$0xff]
    %v94 = vld [vmem:[#allocation2 + $0x1c8] sm:$0xff]
    %v95 = vld [vmem:[#allocation2 + $0x1d0] sm:$0xf]
    %v96 = vld [vmem:[#allocation2 + $0x1d4] sm:$0xff]
    %v97 = vld [vmem:[#allocation2 + $0x1dc] sm:$0xff]
    %v98 = vld [vmem:[#allocation2 + $0x1e4] sm:$0xff]
    %v99 = vld [vmem:[#allocation2 + $0x1ec] sm:$0xff]
    %v100 = vld [vmem:[#allocation2 + $0x1f4] sm:$0xff]
    %v101 = vld [vmem:[#allocation2 + $0x1fc] sm:$0xff]
    %v102 = vld [vmem:[#allocation2 + $0x204] sm:$0xf]
    %v103 = vld [vmem:[#allocation2 + $0x208] sm:$0xff]
    %v104 = vld [vmem:[#allocation2 + $0x210] sm:$0xff]
    %v105 = vld [vmem:[#allocation2 + $0x218] sm:$0xff]
    %v106 = vld [vmem:[#allocation2 + $0x220] sm:$0xff]
    %v107 = vld [vmem:[#allocation2 + $0x228] sm:$0xff]
    %v108 = vld [vmem:[#allocation2 + $0x230] sm:$0xff]
    %v109 = vld [vmem:[#allocation2 + $0x238] sm:$0xf]
    %v110 = vld [vmem:[#allocation2 + $0x23c] sm:$0xff]
    %v111 = vld [vmem:[#allocation2 + $0x244] sm:$0xff]
    %v112 = vld [vmem:[#allocation2 + $0x24c] sm:$0xff]
    %v113 = vld [vmem:[#allocation2 + $0x254] sm:$0xff]
    %v114 = vld [vmem:[#allocation2 + $0x25c] sm:$0xff]
    %v115 = vld [vmem:[#allocation2 + $0x264] sm:$0xff]
    %v116 = vld [vmem:[#allocation2 + $0x26c] sm:$0xf]
    %v117 = vld [vmem:[#allocation2 + $0x270] sm:$0xff]
    %v118 = vld [vmem:[#allocation2 + $0x278] sm:$0xff]
    %v119 = vld [vmem:[#allocation2 + $0x280] sm:$0xff]
    %v120 = vld [vmem:[#allocation2 + $0x288] sm:$0xff]
    %v121 = vld [vmem:[#allocation2 + $0x290] sm:$0xff]
    %v122 = vld [vmem:[#allocation2 + $0x298] sm:$0xff]
    %v123 = vld [vmem:[#allocation2 + $0x2a0] sm:$0xf]
    %v124 = vld [vmem:[#allocation2 + $0x2a4] sm:$0xff]
    %v125 = vld [vmem:[#allocation2 + $0x2ac] sm:$0xff]
    %v126 = vld [vmem:[#allocation2 + $0x2b4] sm:$0xff]
    %v127 = vld [vmem:[#allocation2 + $0x2bc] sm:$0xff]
    %v128 = vld [vmem:[#allocation2 + $0x2c4] sm:$0xff]
    %v129 = vld [vmem:[#allocation2 + $0x2cc] sm:$0xff]
    %v130 = vld [vmem:[#allocation2 + $0x2d4] sm:$0xf]
    %v131 = vld [vmem:[#allocation2 + $0x2d8] sm:$0xff]
    %v132 = vld [vmem:[#allocation2 + $0x2e0] sm:$0xff]
    %v133 = vld [vmem:[#allocation2 + $0x2e8] sm:$0xff]
    %v134 = vld [vmem:[#allocation2 + $0x2f0] sm:$0xff]
    %v135 = vld [vmem:[#allocation2 + $0x2f8] sm:$0xff]
    %v136 = vld [vmem:[#allocation2 + $0x300] sm:$0xff]
    %v137 = vld [vmem:[#allocation2 + $0x308] sm:$0xf]
    %v138 = vld [vmem:[#allocation2 + $0x30c] sm:$0xff]
    %v139 = vld [vmem:[#allocation2 + $0x314] sm:$0xff]
    %v140 = vld [vmem:[#allocation2 + $0x31c] sm:$0xff]
    %v141 = vld [vmem:[#allocation2 + $0x324] sm:$0xff]
    %v142 = vld [vmem:[#allocation2 + $0x32c] sm:$0xff]
    %v143 = vld [vmem:[#allocation2 + $0x334] sm:$0xff]
    %v144 = vld [vmem:[#allocation2 + $0x33c] sm:$0xf]
    %v145 = vld [vmem:[%s2] sm:$0xff]
    %v146 = vld [vmem:[%s2 + $0x8] sm:$0x1f]
    %v149 = vlaneseq
    %v150 = vshrl.u32 %v149, 7
    %v151 = vsub.s32 0, %v150
    %v152 = vrot.slane %v145, %v151
    %v153 = vlaneseq
    %v154 = vshrl.u32 %v153, 7
    %v155 = vsub.s32 1, %v154
    %v156 = vrot.slane %v145, %v155
    %v157 = vlaneseq
    %v158 = vshrl.u32 %v157, 7
    %v159 = vsub.s32 2, %v158
    %v160 = vrot.slane %v145, %v159
    %v161 = vlaneseq
    %v162 = vshrl.u32 %v161, 7
    %v163 = vsub.s32 3, %v162
    %v164 = vrot.slane %v145, %v163
    %v165 = vlaneseq
    %v166 = vshrl.u32 %v165, 7
    %v167 = vsub.s32 4, %v166
    %v168 = vrot.slane %v145, %v167
    %v169 = vlaneseq
    %v170 = vshrl.u32 %v169, 7
    %v171 = vsub.s32 5, %v170
    %v172 = vrot.slane %v145, %v171
    %v173 = vlaneseq
    %v174 = vshrl.u32 %v173, 7
    %v175 = vsub.s32 6, %v174
    %v176 = vrot.slane %v145, %v175
    %v177 = vlaneseq
    %v178 = vshrl.u32 %v177, 7
    %v179 = vsub.s32 7, %v178
    %v180 = vrot.slane %v145, %v179
    %v181 = vlaneseq
    %v182 = vshrl.u32 %v181, 7
    %v183 = vsub.s32 0, %v182
    %v184 = vrot.slane %v146, %v183
    %v185 = vlaneseq
    %v186 = vshrl.u32 %v185, 7
    %v187 = vsub.s32 1, %v186
    %v188 = vrot.slane %v146, %v187
    %v189 = vlaneseq
    %v190 = vshrl.u32 %v189, 7
    %v191 = vsub.s32 2, %v190
    %v192 = vrot.slane %v146, %v191
    %v193 = vlaneseq
    %v194 = vshrl.u32 %v193, 7
    %v195 = vsub.s32 3, %v194
    %v196 = vrot.slane %v146, %v195
    %v197 = vlaneseq
    %v198 = vshrl.u32 %v197, 7
    %v199 = vsub.s32 4, %v198
    %v200 = vrot.slane %v146, %v199
    %v218 = vunpack.c.l.b16 %v29
    %v219 = vunpack.c.l.b16 %v30
    %v220 = vunpack.c.l.b16 %v31
    %v221 = vunpack.c.l.b16 %v32
    %v222 = vpack.c.b16 %v219, %v218
    %v223 = vpack.c.b16 %v221, %v220
    %v338 = vunpack.c.l.b16 %v33
    %v339 = vunpack.c.h.b16 %v33
    %v340 = vunpack.c.l.b16 %v34
    %v341 = vunpack.c.h.b16 %v34
    %v342 = vunpack.c.l.b16 %v35
    %v343 = vunpack.c.h.b16 %v35
    %v344 = vunpack.c.l.b16 %v36
    %v345 = vunpack.c.h.b16 %v36
    %v346 = vunpack.c.l.b16 %v37
    %v347 = vunpack.c.h.b16 %v37
    %v348 = vunpack.c.l.b16 %v38
    %v349 = vunpack.c.h.b16 %v38
    %v350 = vunpack.c.l.b16 %v39
    %v351 = vunpack.c.l.b16 %v40
    %v352 = vunpack.c.h.b16 %v40
    %v353 = vunpack.c.l.b16 %v41
    %v354 = vunpack.c.h.b16 %v41
    %v355 = vunpack.c.l.b16 %v42
    %v356 = vunpack.c.h.b16 %v42
    %v357 = vunpack.c.l.b16 %v43
    %v358 = vunpack.c.h.b16 %v43
    %v359 = vunpack.c.l.b16 %v44
    %v360 = vunpack.c.h.b16 %v44
    %v361 = vunpack.c.l.b16 %v45
    %v362 = vunpack.c.h.b16 %v45
    %v363 = vunpack.c.l.b16 %v46
    %v364 = vunpack.c.l.b16 %v47
    %v365 = vunpack.c.h.b16 %v47
    %v366 = vunpack.c.l.b16 %v48
    %v367 = vunpack.c.h.b16 %v48
    %v368 = vunpack.c.l.b16 %v49
    %v369 = vunpack.c.h.b16 %v49
    %v370 = vunpack.c.l.b16 %v50
    %v371 = vunpack.c.h.b16 %v50
    %v372 = vunpack.c.l.b16 %v51
    %v373 = vunpack.c.h.b16 %v51
    %v374 = vunpack.c.l.b16 %v52
    %v375 = vunpack.c.h.b16 %v52
    %v376 = vunpack.c.l.b16 %v53
    %v377 = vunpack.c.l.b16 %v54
    %v378 = vunpack.c.h.b16 %v54
    %v379 = vunpack.c.l.b16 %v55
    %v380 = vunpack.c.h.b16 %v55
    %v381 = vunpack.c.l.b16 %v56
    %v382 = vunpack.c.h.b16 %v56
    %v383 = vunpack.c.l.b16 %v57
    %v384 = vunpack.c.h.b16 %v57
    %v385 = vunpack.c.l.b16 %v58
    %v386 = vunpack.c.h.b16 %v58
    %v387 = vunpack.c.l.b16 %v59
    %v388 = vunpack.c.h.b16 %v59
    %v389 = vunpack.c.l.b16 %v60
    %v390 = vunpack.c.l.b16 %v61
    %v391 = vunpack.c.h.b16 %v61
    %v392 = vunpack.c.l.b16 %v62
    %v393 = vunpack.c.h.b16 %v62
    %v394 = vunpack.c.l.b16 %v63
    %v395 = vunpack.c.h.b16 %v63
    %v396 = vunpack.c.l.b16 %v64
    %v397 = vunpack.c.h.b16 %v64
    %v398 = vunpack.c.l.b16 %v65
    %v399 = vunpack.c.h.b16 %v65
    %v400 = vunpack.c.l.b16 %v66
    %v401 = vunpack.c.h.b16 %v66
    %v402 = vunpack.c.l.b16 %v67
    %v403 = vunpack.c.l.b16 %v68
    %v404 = vunpack.c.h.b16 %v68
    %v405 = vunpack.c.l.b16 %v69
    %v406 = vunpack.c.h.b16 %v69
    %v407 = vunpack.c.l.b16 %v70
    %v408 = vunpack.c.h.b16 %v70
    %v409 = vunpack.c.l.b16 %v71
    %v410 = vunpack.c.h.b16 %v71
    %v411 = vunpack.c.l.b16 %v72
    %v412 = vunpack.c.h.b16 %v72
    %v413 = vunpack.c.l.b16 %v73
    %v414 = vunpack.c.h.b16 %v73
    %v415 = vunpack.c.l.b16 %v74
    %v416 = vunpack.c.l.b16 %v75
    %v417 = vunpack.c.h.b16 %v75
    %v418 = vunpack.c.l.b16 %v76
    %v419 = vunpack.c.h.b16 %v76
    %v420 = vunpack.c.l.b16 %v77
    %v421 = vunpack.c.h.b16 %v77
    %v422 = vunpack.c.l.b16 %v78
    %v423 = vunpack.c.h.b16 %v78
    %v424 = vunpack.c.l.b16 %v79
    %v425 = vunpack.c.h.b16 %v79
    %v426 = vunpack.c.l.b16 %v80
    %v427 = vunpack.c.h.b16 %v80
    %v428 = vunpack.c.l.b16 %v81
    %v429 = vunpack.c.l.b16 %v82
    %v430 = vunpack.c.h.b16 %v82
    %v431 = vunpack.c.l.b16 %v83
    %v432 = vunpack.c.h.b16 %v83
    %v433 = vunpack.c.l.b16 %v84
    %v434 = vunpack.c.h.b16 %v84
    %v435 = vunpack.c.l.b16 %v85
    %v436 = vunpack.c.h.b16 %v85
    %v437 = vunpack.c.l.b16 %v86
    %v438 = vunpack.c.h.b16 %v86
    %v439 = vunpack.c.l.b16 %v87
    %v440 = vunpack.c.h.b16 %v87
    %v441 = vunpack.c.l.b16 %v88
    %v442 = vunpack.c.l.b16 %v89
    %v443 = vunpack.c.h.b16 %v89
    %v444 = vunpack.c.l.b16 %v90
    %v445 = vunpack.c.h.b16 %v90
    %v446 = vunpack.c.l.b16 %v91
    %v447 = vunpack.c.h.b16 %v91
    %v448 = vunpack.c.l.b16 %v92
    %v449 = vunpack.c.h.b16 %v92
    %v450 = vunpack.c.l.b16 %v93
    %v451 = vunpack.c.h.b16 %v93
    %v452 = vunpack.c.l.b16 %v94
    %v453 = vunpack.c.h.b16 %v94
    %v454 = vunpack.c.l.b16 %v95
    %v455 = vunpack.c.l.b16 %v96
    %v456 = vunpack.c.h.b16 %v96
    %v457 = vunpack.c.l.b16 %v97
    %v458 = vunpack.c.h.b16 %v97
    %v459 = vunpack.c.l.b16 %v98
    %v460 = vunpack.c.h.b16 %v98
    %v461 = vunpack.c.l.b16 %v99
    %v462 = vunpack.c.h.b16 %v99
    %v463 = vunpack.c.l.b16 %v100
    %v464 = vunpack.c.h.b16 %v100
    %v465 = vunpack.c.l.b16 %v101
    %v466 = vunpack.c.h.b16 %v101
    %v467 = vunpack.c.l.b16 %v102
    %v468 = vunpack.c.l.b16 %v103
    %v469 = vunpack.c.h.b16 %v103
    %v470 = vunpack.c.l.b16 %v104
    %v471 = vunpack.c.h.b16 %v104
    %v472 = vunpack.c.l.b16 %v105
    %v473 = vunpack.c.h.b16 %v105
    %v474 = vunpack.c.l.b16 %v106
    %v475 = vunpack.c.h.b16 %v106
    %v476 = vunpack.c.l.b16 %v107
    %v477 = vunpack.c.h.b16 %v107
    %v478 = vunpack.c.l.b16 %v108
    %v479 = vunpack.c.h.b16 %v108
    %v480 = vunpack.c.l.b16 %v109
    %v481 = vunpack.c.l.b16 %v110
    %v482 = vunpack.c.h.b16 %v110
    %v483 = vunpack.c.l.b16 %v111
    %v484 = vunpack.c.h.b16 %v111
    %v485 = vunpack.c.l.b16 %v112
    %v486 = vunpack.c.h.b16 %v112
    %v487 = vunpack.c.l.b16 %v113
    %v488 = vunpack.c.h.b16 %v113
    %v489 = vunpack.c.l.b16 %v114
    %v490 = vunpack.c.h.b16 %v114
    %v491 = vunpack.c.l.b16 %v115
    %v492 = vunpack.c.h.b16 %v115
    %v493 = vunpack.c.l.b16 %v116
    %v494 = vunpack.c.l.b16 %v117
    %v495 = vunpack.c.h.b16 %v117
    %v496 = vunpack.c.l.b16 %v118
    %v497 = vunpack.c.h.b16 %v118
    %v498 = vunpack.c.l.b16 %v119
    %v499 = vunpack.c.h.b16 %v119
    %v500 = vunpack.c.l.b16 %v120
    %v501 = vunpack.c.h.b16 %v120
    %v502 = vunpack.c.l.b16 %v121
    %v503 = vunpack.c.h.b16 %v121
    %v504 = vunpack.c.l.b16 %v122
    %v505 = vunpack.c.h.b16 %v122
    %v506 = vunpack.c.l.b16 %v123
    %v507 = vunpack.c.l.b16 %v124
    %v508 = vunpack.c.h.b16 %v124
    %v509 = vunpack.c.l.b16 %v125
    %v510 = vunpack.c.h.b16 %v125
    %v511 = vunpack.c.l.b16 %v126
    %v512 = vunpack.c.h.b16 %v126
    %v513 = vunpack.c.l.b16 %v127
    %v514 = vunpack.c.h.b16 %v127
    %v515 = vunpack.c.l.b16 %v128
    %v516 = vunpack.c.h.b16 %v128
    %v517 = vunpack.c.l.b16 %v129
    %v518 = vunpack.c.h.b16 %v129
    %v519 = vunpack.c.l.b16 %v130
    %v520 = vunpack.c.l.b16 %v131
    %v521 = vunpack.c.h.b16 %v131
    %v522 = vunpack.c.l.b16 %v132
    %v523 = vunpack.c.h.b16 %v132
    %v524 = vunpack.c.l.b16 %v133
    %v525 = vunpack.c.h.b16 %v133
    %v526 = vunpack.c.l.b16 %v134
    %v527 = vunpack.c.h.b16 %v134
    %v528 = vunpack.c.l.b16 %v135
    %v529 = vunpack.c.h.b16 %v135
    %v530 = vunpack.c.l.b16 %v136
    %v531 = vunpack.c.h.b16 %v136
    %v532 = vunpack.c.l.b16 %v137
    %v533 = vunpack.c.l.b16 %v138
    %v534 = vunpack.c.h.b16 %v138
    %v535 = vunpack.c.l.b16 %v139
    %v536 = vunpack.c.h.b16 %v139
    %v537 = vunpack.c.l.b16 %v140
    %v538 = vunpack.c.h.b16 %v140
    %v539 = vunpack.c.l.b16 %v141
    %v540 = vunpack.c.h.b16 %v141
    %v541 = vunpack.c.l.b16 %v142
    %v542 = vunpack.c.h.b16 %v142
    %v543 = vunpack.c.l.b16 %v143
    %v544 = vunpack.c.h.b16 %v143
    %v545 = vunpack.c.l.b16 %v144
    %v546 = vpack.c.b16 %v351, %v338
    %v547 = vpack.c.b16 %v352, %v339
    %v548 = vpack.c.b16 %v353, %v340
    %v549 = vpack.c.b16 %v354, %v341
    %v550 = vpack.c.b16 %v355, %v342
    %v551 = vpack.c.b16 %v356, %v343
    %v552 = vpack.c.b16 %v357, %v344
    %v553 = vpack.c.b16 %v358, %v345
    %v554 = vpack.c.b16 %v359, %v346
    %v555 = vpack.c.b16 %v360, %v347
    %v556 = vpack.c.b16 %v361, %v348
    %v557 = vpack.c.b16 %v362, %v349
    %v558 = vpack.c.b16 %v363, %v350
    %v559 = vpack.c.b16 %v377, %v364
    %v560 = vpack.c.b16 %v378, %v365
    %v561 = vpack.c.b16 %v379, %v366
    %v562 = vpack.c.b16 %v380, %v367
    %v563 = vpack.c.b16 %v381, %v368
    %v564 = vpack.c.b16 %v382, %v369
    %v565 = vpack.c.b16 %v383, %v370
    %v566 = vpack.c.b16 %v384, %v371
    %v567 = vpack.c.b16 %v385, %v372
    %v568 = vpack.c.b16 %v386, %v373
    %v569 = vpack.c.b16 %v387, %v374
    %v570 = vpack.c.b16 %v388, %v375
    %v571 = vpack.c.b16 %v389, %v376
    %v572 = vpack.c.b16 %v403, %v390
    %v573 = vpack.c.b16 %v404, %v391
    %v574 = vpack.c.b16 %v405, %v392
    %v575 = vpack.c.b16 %v406, %v393
    %v576 = vpack.c.b16 %v407, %v394
    %v577 = vpack.c.b16 %v408, %v395
    %v578 = vpack.c.b16 %v409, %v396
    %v579 = vpack.c.b16 %v410, %v397
    %v580 = vpack.c.b16 %v411, %v398
    %v581 = vpack.c.b16 %v412, %v399
    %v582 = vpack.c.b16 %v413, %v400
    %v583 = vpack.c.b16 %v414, %v401
    %v584 = vpack.c.b16 %v415, %v402
    %v585 = vpack.c.b16 %v429, %v416
    %v586 = vpack.c.b16 %v430, %v417
    %v587 = vpack.c.b16 %v431, %v418
    %v588 = vpack.c.b16 %v432, %v419
    %v589 = vpack.c.b16 %v433, %v420
    %v590 = vpack.c.b16 %v434, %v421
    %v591 = vpack.c.b16 %v435, %v422
    %v592 = vpack.c.b16 %v436, %v423
    %v593 = vpack.c.b16 %v437, %v424
    %v594 = vpack.c.b16 %v438, %v425
    %v595 = vpack.c.b16 %v439, %v426
    %v596 = vpack.c.b16 %v440, %v427
    %v597 = vpack.c.b16 %v441, %v428
    %v598 = vpack.c.b16 %v455, %v442
    %v599 = vpack.c.b16 %v456, %v443
    %v600 = vpack.c.b16 %v457, %v444
    %v601 = vpack.c.b16 %v458, %v445
    %v602 = vpack.c.b16 %v459, %v446
    %v603 = vpack.c.b16 %v460, %v447
    %v604 = vpack.c.b16 %v461, %v448
    %v605 = vpack.c.b16 %v462, %v449
    %v606 = vpack.c.b16 %v463, %v450
    %v607 = vpack.c.b16 %v464, %v451
    %v608 = vpack.c.b16 %v465, %v452
    %v609 = vpack.c.b16 %v466, %v453
    %v610 = vpack.c.b16 %v467, %v454
    %v611 = vpack.c.b16 %v481, %v468
    %v612 = vpack.c.b16 %v482, %v469
    %v613 = vpack.c.b16 %v483, %v470
    %v614 = vpack.c.b16 %v484, %v471
    %v615 = vpack.c.b16 %v485, %v472
    %v616 = vpack.c.b16 %v486, %v473
    %v617 = vpack.c.b16 %v487, %v474
    %v618 = vpack.c.b16 %v488, %v475
    %v619 = vpack.c.b16 %v489, %v476
    %v620 = vpack.c.b16 %v490, %v477
    %v621 = vpack.c.b16 %v491, %v478
    %v622 = vpack.c.b16 %v492, %v479
    %v623 = vpack.c.b16 %v493, %v480
    %v624 = vpack.c.b16 %v507, %v494
    %v625 = vpack.c.b16 %v508, %v495
    %v626 = vpack.c.b16 %v509, %v496
    %v627 = vpack.c.b16 %v510, %v497
    %v628 = vpack.c.b16 %v511, %v498
    %v629 = vpack.c.b16 %v512, %v499
    %v630 = vpack.c.b16 %v513, %v500
    %v631 = vpack.c.b16 %v514, %v501
    %v632 = vpack.c.b16 %v515, %v502
    %v633 = vpack.c.b16 %v516, %v503
    %v634 = vpack.c.b16 %v517, %v504
    %v635 = vpack.c.b16 %v518, %v505
    %v636 = vpack.c.b16 %v519, %v506
    %v637 = vpack.c.b16 %v533, %v520
    %v638 = vpack.c.b16 %v534, %v521
    %v639 = vpack.c.b16 %v535, %v522
    %v640 = vpack.c.b16 %v536, %v523
    %v641 = vpack.c.b16 %v537, %v524
    %v642 = vpack.c.b16 %v538, %v525
    %v643 = vpack.c.b16 %v539, %v526
    %v644 = vpack.c.b16 %v540, %v527
    %v645 = vpack.c.b16 %v541, %v528
    %v646 = vpack.c.b16 %v542, %v529
    %v647 = vpack.c.b16 %v543, %v530
    %v648 = vpack.c.b16 %v544, %v531
    %v649 = vpack.c.b16 %v545, %v532
    %754 = vmatprep.subr.bf16.mxu0 %v638
    %755 = vmatpush1.bf16.msra.mxu0 %v637
    %756 = vmatprep.subr.bf16.mxu0 %v625
    %757 = vmatpush1.bf16.msra.mxu0 %v624
    %758 = vmatprep.subr.bf16.mxu0 %v612
    %759 = vmatpush1.bf16.msra.mxu0 %v611
    %760 = vmatprep.subr.bf16.mxu0 %v599
    %761 = vmatpush1.bf16.msra.mxu0 %v598
    %762 = vmatprep.subr.bf16.mxu0 %v586
    %763 = vmatpush1.bf16.msra.mxu0 %v585
    %764 = vmatprep.subr.bf16.mxu0 %v573
    %765 = vmatpush1.bf16.msra.mxu0 %v572
    %766 = vmatprep.subr.bf16.mxu0 %v560
    %767 = vmatpush1.bf16.msra.mxu0 %v559
    %768 = vmatprep.subr.bf16.mxu0 %v547
    %769 = vmatpush1.bf16.msra.mxu0 %v546
    %770 = vmatprep.subr.bf16.mxu0 0
    %771 = vmatpush2.bf16.msra.mxu0 0
    %772 = vmatprep.subr.bf16.mxu0 0
    %773 = vmatpush2.bf16.msra.mxu0 0
    %774 = vmatprep.subr.bf16.mxu0 0
    %775 = vmatpush2.bf16.msra.mxu0 0
    %776 = vmatprep.subr.bf16.mxu0 0
    %777 = vmatpush2.bf16.msra.mxu0 0
    %778 = vmatprep.subr.bf16.mxu0 0
    %779 = vmatpush2.bf16.msra.mxu0 0
    %780 = vmatprep.subr.bf16.mxu0 0
    %781 = vmatpush2.bf16.msra.mxu0 0
    %782 = vmatprep.subr.bf16.mxu0 0
    %783 = vmatpush2.bf16.msra.mxu0 0
    %784 = vmatprep.subr.bf16.mxu0 0
    %785 = vmatpush2.bf16.msra.mxu0 0
    %786 = vmatprep.mubr.bf16.mxu0 0
    %787 = vmatmul.mubr.bf16.gmra.mxu0 %v222
    %v788 = vpop.f32.mrf.mxu0
    %v789 = vadd.f32 %v152, %v788
    %v790 = vpop.f32.mrf.mxu0
    %v791 = vadd.f32 %v156, %v790
    %v792 = vpop.f32.mrf.mxu0
    %v793 = vadd.f32 %v152, %v792
    %v794 = vpop.f32.mrf.mxu0
    %v795 = vadd.f32 %v156, %v794
    %796 = vmatprep.mubr.bf16.mxu0 0
    %797 = vmatmul.mubr.bf16.gmra.mxu0 %v223
    %v798 = vpop.f32.mrf.mxu0
    %v799 = vadd.f32 %v152, %v798
    %v800 = vpop.f32.mrf.mxu0
    %v801 = vadd.f32 %v156, %v800
    %v802 = vpop.f32.mrf.mxu0
    %v803 = vadd.f32 %v152, %v802
    %v804 = vpop.f32.mrf.mxu0
    %v805 = vadd.f32 %v156, %v804
    %806 = vdwg.mxu0
    %807 = vmatprep.subr.bf16.mxu0 %v640
    %808 = vmatpush1.bf16.msra.mxu0 %v639
    %809 = vmatprep.subr.bf16.mxu0 %v627
    %810 = vmatpush1.bf16.msra.mxu0 %v626
    %811 = vmatprep.subr.bf16.mxu0 %v614
    %812 = vmatpush1.bf16.msra.mxu0 %v613
    %813 = vmatprep.subr.bf16.mxu0 %v601
    %814 = vmatpush1.bf16.msra.mxu0 %v600
    %815 = vmatprep.subr.bf16.mxu0 %v588
    %816 = vmatpush1.bf16.msra.mxu0 %v587
    %817 = vmatprep.subr.bf16.mxu0 %v575
    %818 = vmatpush1.bf16.msra.mxu0 %v574
    %819 = vmatprep.subr.bf16.mxu0 %v562
    %820 = vmatpush1.bf16.msra.mxu0 %v561
    %821 = vmatprep.subr.bf16.mxu0 %v549
    %822 = vmatpush1.bf16.msra.mxu0 %v548
    %823 = vmatprep.subr.bf16.mxu0 0
    %824 = vmatpush2.bf16.msra.mxu0 0
    %825 = vmatprep.subr.bf16.mxu0 0
    %826 = vmatpush2.bf16.msra.mxu0 0
    %827 = vmatprep.subr.bf16.mxu0 0
    %828 = vmatpush2.bf16.msra.mxu0 0
    %829 = vmatprep.subr.bf16.mxu0 0
    %830 = vmatpush2.bf16.msra.mxu0 0
    %831 = vmatprep.subr.bf16.mxu0 0
    %832 = vmatpush2.bf16.msra.mxu0 0
    %833 = vmatprep.subr.bf16.mxu0 0
    %834 = vmatpush2.bf16.msra.mxu0 0
    %835 = vmatprep.subr.bf16.mxu0 0
    %836 = vmatpush2.bf16.msra.mxu0 0
    %837 = vmatprep.subr.bf16.mxu0 0
    %838 = vmatpush2.bf16.msra.mxu0 0
    %839 = vmatprep.mubr.bf16.mxu0 0
    %840 = vmatmul.mubr.bf16.gmra.mxu0 %v222
    %v841 = vpop.f32.mrf.mxu0
    %v842 = vadd.f32 %v160, %v841
    %v843 = vpop.f32.mrf.mxu0
    %v844 = vadd.f32 %v164, %v843
    %v845 = vpop.f32.mrf.mxu0
    %v846 = vadd.f32 %v160, %v845
    %v847 = vpop.f32.mrf.mxu0
    %v848 = vadd.f32 %v164, %v847
    %849 = vmatprep.mubr.bf16.mxu0 0
    %850 = vmatmul.mubr.bf16.gmra.mxu0 %v223
    %v851 = vpop.f32.mrf.mxu0
    %v852 = vadd.f32 %v160, %v851
    %v853 = vpop.f32.mrf.mxu0
    %v854 = vadd.f32 %v164, %v853
    %v855 = vpop.f32.mrf.mxu0
    %v856 = vadd.f32 %v160, %v855
    %v857 = vpop.f32.mrf.mxu0
    %v858 = vadd.f32 %v164, %v857
    %859 = vdwg.mxu0
    %860 = vmatprep.subr.bf16.mxu0 %v642
    %861 = vmatpush1.bf16.msra.mxu0 %v641
    %862 = vmatprep.subr.bf16.mxu0 %v629
    %863 = vmatpush1.bf16.msra.mxu0 %v628
    %864 = vmatprep.subr.bf16.mxu0 %v616
    %865 = vmatpush1.bf16.msra.mxu0 %v615
    %866 = vmatprep.subr.bf16.mxu0 %v603
    %867 = vmatpush1.bf16.msra.mxu0 %v602
    %868 = vmatprep.subr.bf16.mxu0 %v590
    %869 = vmatpush1.bf16.msra.mxu0 %v589
    %870 = vmatprep.subr.bf16.mxu0 %v577
    %871 = vmatpush1.bf16.msra.mxu0 %v576
    %872 = vmatprep.subr.bf16.mxu0 %v564
    %873 = vmatpush1.bf16.msra.mxu0 %v563
    %874 = vmatprep.subr.bf16.mxu0 %v551
    %875 = vmatpush1.bf16.msra.mxu0 %v550
    %876 = vmatprep.subr.bf16.mxu0 0
    %877 = vmatpush2.bf16.msra.mxu0 0
    %878 = vmatprep.subr.bf16.mxu0 0
    %879 = vmatpush2.bf16.msra.mxu0 0
    %880 = vmatprep.subr.bf16.mxu0 0
    %881 = vmatpush2.bf16.msra.mxu0 0
    %882 = vmatprep.subr.bf16.mxu0 0
    %883 = vmatpush2.bf16.msra.mxu0 0
    %884 = vmatprep.subr.bf16.mxu0 0
    %885 = vmatpush2.bf16.msra.mxu0 0
    %886 = vmatprep.subr.bf16.mxu0 0
    %887 = vmatpush2.bf16.msra.mxu0 0
    %888 = vmatprep.subr.bf16.mxu0 0
    %889 = vmatpush2.bf16.msra.mxu0 0
    %890 = vmatprep.subr.bf16.mxu0 0
    %891 = vmatpush2.bf16.msra.mxu0 0
    %892 = vmatprep.mubr.bf16.mxu0 0
    %893 = vmatmul.mubr.bf16.gmra.mxu0 %v222
    %v894 = vpop.f32.mrf.mxu0
    %v895 = vadd.f32 %v168, %v894
    %v896 = vpop.f32.mrf.mxu0
    %v897 = vadd.f32 %v172, %v896
    %v898 = vpop.f32.mrf.mxu0
    %v899 = vadd.f32 %v168, %v898
    %v900 = vpop.f32.mrf.mxu0
    %v901 = vadd.f32 %v172, %v900
    %902 = vmatprep.mubr.bf16.mxu0 0
    %903 = vmatmul.mubr.bf16.gmra.mxu0 %v223
    %v904 = vpop.f32.mrf.mxu0
    %v905 = vadd.f32 %v168, %v904
    %v906 = vpop.f32.mrf.mxu0
    %v907 = vadd.f32 %v172, %v906
    %v908 = vpop.f32.mrf.mxu0
    %v909 = vadd.f32 %v168, %v908
    %v910 = vpop.f32.mrf.mxu0
    %v911 = vadd.f32 %v172, %v910
    %912 = vdwg.mxu0
    %913 = vmatprep.subr.bf16.mxu0 %v644
    %914 = vmatpush1.bf16.msra.mxu0 %v643
    %915 = vmatprep.subr.bf16.mxu0 %v631
    %916 = vmatpush1.bf16.msra.mxu0 %v630
    %917 = vmatprep.subr.bf16.mxu0 %v618
    %918 = vmatpush1.bf16.msra.mxu0 %v617
    %919 = vmatprep.subr.bf16.mxu0 %v605
    %920 = vmatpush1.bf16.msra.mxu0 %v604
    %921 = vmatprep.subr.bf16.mxu0 %v592
    %922 = vmatpush1.bf16.msra.mxu0 %v591
    %923 = vmatprep.subr.bf16.mxu0 %v579
    %924 = vmatpush1.bf16.msra.mxu0 %v578
    %925 = vmatprep.subr.bf16.mxu0 %v566
    %926 = vmatpush1.bf16.msra.mxu0 %v565
    %927 = vmatprep.subr.bf16.mxu0 %v553
    %928 = vmatpush1.bf16.msra.mxu0 %v552
    %929 = vmatprep.subr.bf16.mxu0 0
    %930 = vmatpush2.bf16.msra.mxu0 0
    %931 = vmatprep.subr.bf16.mxu0 0
    %932 = vmatpush2.bf16.msra.mxu0 0
    %933 = vmatprep.subr.bf16.mxu0 0
    %934 = vmatpush2.bf16.msra.mxu0 0
    %935 = vmatprep.subr.bf16.mxu0 0
    %936 = vmatpush2.bf16.msra.mxu0 0
    %937 = vmatprep.subr.bf16.mxu0 0
    %938 = vmatpush2.bf16.msra.mxu0 0
    %939 = vmatprep.subr.bf16.mxu0 0
    %940 = vmatpush2.bf16.msra.mxu0 0
    %941 = vmatprep.subr.bf16.mxu0 0
    %942 = vmatpush2.bf16.msra.mxu0 0
    %943 = vmatprep.subr.bf16.mxu0 0
    %944 = vmatpush2.bf16.msra.mxu0 0
    %945 = vmatprep.mubr.bf16.mxu0 0
    %946 = vmatmul.mubr.bf16.gmra.mxu0 %v222
    %v947 = vpop.f32.mrf.mxu0
    %v948 = vadd.f32 %v176, %v947
    %v949 = vpop.f32.mrf.mxu0
    %v950 = vadd.f32 %v180, %v949
    %v951 = vpop.f32.mrf.mxu0
    %v952 = vadd.f32 %v176, %v951
    %v953 = vpop.f32.mrf.mxu0
    %v954 = vadd.f32 %v180, %v953
    %955 = vmatprep.mubr.bf16.mxu0 0
    %956 = vmatmul.mubr.bf16.gmra.mxu0 %v223
    %v957 = vpop.f32.mrf.mxu0
    %v958 = vadd.f32 %v176, %v957
    %v959 = vpop.f32.mrf.mxu0
    %v960 = vadd.f32 %v180, %v959
    %v961 = vpop.f32.mrf.mxu0
    %v962 = vadd.f32 %v176, %v961
    %v963 = vpop.f32.mrf.mxu0
    %v964 = vadd.f32 %v180, %v963
    %965 = vdwg.mxu0
    %966 = vmatprep.subr.bf16.mxu0 %v646
    %967 = vmatpush1.bf16.msra.mxu0 %v645
    %968 = vmatprep.subr.bf16.mxu0 %v633
    %969 = vmatpush1.bf16.msra.mxu0 %v632
    %970 = vmatprep.subr.bf16.mxu0 %v620
    %971 = vmatpush1.bf16.msra.mxu0 %v619
    %972 = vmatprep.subr.bf16.mxu0 %v607
    %973 = vmatpush1.bf16.msra.mxu0 %v606
    %974 = vmatprep.subr.bf16.mxu0 %v594
    %975 = vmatpush1.bf16.msra.mxu0 %v593
    %976 = vmatprep.subr.bf16.mxu0 %v581
    %977 = vmatpush1.bf16.msra.mxu0 %v580
    %978 = vmatprep.subr.bf16.mxu0 %v568
    %979 = vmatpush1.bf16.msra.mxu0 %v567
    %980 = vmatprep.subr.bf16.mxu0 %v555
    %981 = vmatpush1.bf16.msra.mxu0 %v554
    %982 = vmatprep.subr.bf16.mxu0 0
    %983 = vmatpush2.bf16.msra.mxu0 0
    %984 = vmatprep.subr.bf16.mxu0 0
    %985 = vmatpush2.bf16.msra.mxu0 0
    %986 = vmatprep.subr.bf16.mxu0 0
    %987 = vmatpush2.bf16.msra.mxu0 0
    %988 = vmatprep.subr.bf16.mxu0 0
    %989 = vmatpush2.bf16.msra.mxu0 0
    %990 = vmatprep.subr.bf16.mxu0 0
    %991 = vmatpush2.bf16.msra.mxu0 0
    %992 = vmatprep.subr.bf16.mxu0 0
    %993 = vmatpush2.bf16.msra.mxu0 0
    %994 = vmatprep.subr.bf16.mxu0 0
    %995 = vmatpush2.bf16.msra.mxu0 0
    %996 = vmatprep.subr.bf16.mxu0 0
    %997 = vmatpush2.bf16.msra.mxu0 0
    %998 = vmatprep.mubr.bf16.mxu0 0
    %999 = vmatmul.mubr.bf16.gmra.mxu0 %v222
    %v1000 = vpop.f32.mrf.mxu0
    %v1001 = vadd.f32 %v184, %v1000
    %v1002 = vpop.f32.mrf.mxu0
    %v1003 = vadd.f32 %v188, %v1002
    %v1004 = vpop.f32.mrf.mxu0
    %v1005 = vadd.f32 %v184, %v1004
    %v1006 = vpop.f32.mrf.mxu0
    %v1007 = vadd.f32 %v188, %v1006
    %1008 = vmatprep.mubr.bf16.mxu0 0
    %1009 = vmatmul.mubr.bf16.gmra.mxu0 %v223
    %v1010 = vpop.f32.mrf.mxu0
    %v1011 = vadd.f32 %v184, %v1010
    %v1012 = vpop.f32.mrf.mxu0
    %v1013 = vadd.f32 %v188, %v1012
    %v1014 = vpop.f32.mrf.mxu0
    %v1015 = vadd.f32 %v184, %v1014
    %v1016 = vpop.f32.mrf.mxu0
    %v1017 = vadd.f32 %v188, %v1016
    %1018 = vdwg.mxu0
    %1019 = vmatprep.subr.bf16.mxu0 %v648
    %1020 = vmatpush1.bf16.msra.mxu0 %v647
    %1021 = vmatprep.subr.bf16.mxu0 %v635
    %1022 = vmatpush1.bf16.msra.mxu0 %v634
    %1023 = vmatprep.subr.bf16.mxu0 %v622
    %1024 = vmatpush1.bf16.msra.mxu0 %v621
    %1025 = vmatprep.subr.bf16.mxu0 %v609
    %1026 = vmatpush1.bf16.msra.mxu0 %v608
    %1027 = vmatprep.subr.bf16.mxu0 %v596
    %1028 = vmatpush1.bf16.msra.mxu0 %v595
    %1029 = vmatprep.subr.bf16.mxu0 %v583
    %1030 = vmatpush1.bf16.msra.mxu0 %v582
    %1031 = vmatprep.subr.bf16.mxu0 %v570
    %1032 = vmatpush1.bf16.msra.mxu0 %v569
    %1033 = vmatprep.subr.bf16.mxu0 %v557
    %1034 = vmatpush1.bf16.msra.mxu0 %v556
    %1035 = vmatprep.subr.bf16.mxu0 0
    %1036 = vmatpush2.bf16.msra.mxu0 0
    %1037 = vmatprep.subr.bf16.mxu0 0
    %1038 = vmatpush2.bf16.msra.mxu0 0
    %1039 = vmatprep.subr.bf16.mxu0 0
    %1040 = vmatpush2.bf16.msra.mxu0 0
    %1041 = vmatprep.subr.bf16.mxu0 0
    %1042 = vmatpush2.bf16.msra.mxu0 0
    %1043 = vmatprep.subr.bf16.mxu0 0
    %1044 = vmatpush2.bf16.msra.mxu0 0
    %1045 = vmatprep.subr.bf16.mxu0 0
    %1046 = vmatpush2.bf16.msra.mxu0 0
    %1047 = vmatprep.subr.bf16.mxu0 0
    %1048 = vmatpush2.bf16.msra.mxu0 0
    %1049 = vmatprep.subr.bf16.mxu0 0
    %1050 = vmatpush2.bf16.msra.mxu0 0
    %1051 = vmatprep.mubr.bf16.mxu0 0
    %1052 = vmatmul.mubr.bf16.gmra.mxu0 %v222
    %v1053 = vpop.f32.mrf.mxu0
    %v1054 = vadd.f32 %v192, %v1053
    %v1055 = vpop.f32.mrf.mxu0
    %v1056 = vadd.f32 %v196, %v1055
    %v1057 = vpop.f32.mrf.mxu0
    %v1058 = vadd.f32 %v192, %v1057
    %v1059 = vpop.f32.mrf.mxu0
    %v1060 = vadd.f32 %v196, %v1059
    %1061 = vmatprep.mubr.bf16.mxu0 0
    %1062 = vmatmul.mubr.bf16.gmra.mxu0 %v223
    %v1063 = vpop.f32.mrf.mxu0
    %v1064 = vadd.f32 %v192, %v1063
    %v1065 = vpop.f32.mrf.mxu0
    %v1066 = vadd.f32 %v196, %v1065
    %v1067 = vpop.f32.mrf.mxu0
    %v1068 = vadd.f32 %v192, %v1067
    %v1069 = vpop.f32.mrf.mxu0
    %v1070 = vadd.f32 %v196, %v1069
    %1071 = vdwg.mxu0
    %1072 = vmatprep.subr.bf16.mxu0 0
    %1073 = vmatpush1.bf16.msra.mxu0 %v649
    %1074 = vmatprep.subr.bf16.mxu0 0
    %1075 = vmatpush1.bf16.msra.mxu0 %v636
    %1076 = vmatprep.subr.bf16.mxu0 0
    %1077 = vmatpush1.bf16.msra.mxu0 %v623
    %1078 = vmatprep.subr.bf16.mxu0 0
    %1079 = vmatpush1.bf16.msra.mxu0 %v610
    %1080 = vmatprep.subr.bf16.mxu0 0
    %1081 = vmatpush1.bf16.msra.mxu0 %v597
    %1082 = vmatprep.subr.bf16.mxu0 0
    %1083 = vmatpush1.bf16.msra.mxu0 %v584
    %1084 = vmatprep.subr.bf16.mxu0 0
    %1085 = vmatpush1.bf16.msra.mxu0 %v571
    %1086 = vmatprep.subr.bf16.mxu0 0
    %1087 = vmatpush1.bf16.msra.mxu0 %v558
    %1088 = vmatprep.subr.bf16.mxu0 0
    %1089 = vmatpush2.bf16.msra.mxu0 0
    %1090 = vmatprep.subr.bf16.mxu0 0
    %1091 = vmatpush2.bf16.msra.mxu0 0
    %1092 = vmatprep.subr.bf16.mxu0 0
    %1093 = vmatpush2.bf16.msra.mxu0 0
    %1094 = vmatprep.subr.bf16.mxu0 0
    %1095 = vmatpush2.bf16.msra.mxu0 0
    %1096 = vmatprep.subr.bf16.mxu0 0
    %1097 = vmatpush2.bf16.msra.mxu0 0
    %1098 = vmatprep.subr.bf16.mxu0 0
    %1099 = vmatpush2.bf16.msra.mxu0 0
    %1100 = vmatprep.subr.bf16.mxu0 0
    %1101 = vmatpush2.bf16.msra.mxu0 0
    %1102 = vmatprep.subr.bf16.mxu0 0
    %1103 = vmatpush2.bf16.msra.mxu0 0
    %1104 = vmatprep.mubr.bf16.mxu0 0
    %1105 = vmatmul.mubr.bf16.gmra.mxu0 %v222
    %v1106 = vpop.f32.mrf.mxu0
    %v1107 = vadd.f32 %v200, %v1106
    %v1108 = vpop.f32.mrf.mxu0
    %v1109 = vpop.f32.mrf.mxu0
    %v1110 = vadd.f32 %v200, %v1109
    %v1111 = vpop.f32.mrf.mxu0
    %1112 = vmatprep.mubr.bf16.mxu0 0
    %1113 = vmatmul.mubr.bf16.gmra.mxu0 %v223
    %v1114 = vpop.f32.mrf.mxu0
    %v1115 = vadd.f32 %v200, %v1114
    %v1116 = vpop.f32.mrf.mxu0
    %v1117 = vpop.f32.mrf.mxu0
    %v1118 = vadd.f32 %v200, %v1117
    %v1119 = vpop.f32.mrf.mxu0
    %1120 = vdwg.mxu0
    %v1121 = vmax.f32 %v789, 0.0
    %v1122 = vmax.f32 %v791, 0.0
    %v1123 = vmax.f32 %v842, 0.0
    %v1124 = vmax.f32 %v844, 0.0
    %v1125 = vmax.f32 %v895, 0.0
    %v1126 = vmax.f32 %v897, 0.0
    %v1127 = vmax.f32 %v948, 0.0
    %v1128 = vmax.f32 %v950, 0.0
    %v1129 = vmax.f32 %v1001, 0.0
    %v1130 = vmax.f32 %v1003, 0.0
    %v1131 = vmax.f32 %v1054, 0.0
    %v1132 = vmax.f32 %v1056, 0.0
    %v1133 = vmax.f32 %v1107, 0.0
    %v1134 = vmax.f32 %v793, 0.0
    %v1135 = vmax.f32 %v795, 0.0
    %v1136 = vmax.f32 %v846, 0.0
    %v1137 = vmax.f32 %v848, 0.0
    %v1138 = vmax.f32 %v899, 0.0
    %v1139 = vmax.f32 %v901, 0.0
    %v1140 = vmax.f32 %v952, 0.0
    %v1141 = vmax.f32 %v954, 0.0
    %v1142 = vmax.f32 %v1005, 0.0
    %v1143 = vmax.f32 %v1007, 0.0
    %v1144 = vmax.f32 %v1058, 0.0
    %v1145 = vmax.f32 %v1060, 0.0
    %v1146 = vmax.f32 %v1110, 0.0
    %v1147 = vmax.f32 %v799, 0.0
    %v1148 = vmax.f32 %v801, 0.0
    %v1149 = vmax.f32 %v852, 0.0
    %v1150 = vmax.f32 %v854, 0.0
    %v1151 = vmax.f32 %v905, 0.0
    %v1152 = vmax.f32 %v907, 0.0
    %v1153 = vmax.f32 %v958, 0.0
    %v1154 = vmax.f32 %v960, 0.0
    %v1155 = vmax.f32 %v1011, 0.0
    %v1156 = vmax.f32 %v1013, 0.0
    %v1157 = vmax.f32 %v1064, 0.0
    %v1158 = vmax.f32 %v1066, 0.0
    %v1159 = vmax.f32 %v1115, 0.0
    %v1160 = vmax.f32 %v803, 0.0
    %v1161 = vmax.f32 %v805, 0.0
    %v1162 = vmax.f32 %v856, 0.0
    %v1163 = vmax.f32 %v858, 0.0
    %v1164 = vmax.f32 %v909, 0.0
    %v1165 = vmax.f32 %v911, 0.0
    %v1166 = vmax.f32 %v962, 0.0
    %v1167 = vmax.f32 %v964, 0.0
    %v1168 = vmax.f32 %v1015, 0.0
    %v1169 = vmax.f32 %v1017, 0.0
    %v1170 = vmax.f32 %v1068, 0.0
    %v1171 = vmax.f32 %v1070, 0.0
    %v1172 = vmax.f32 %v1118, 0.0
    %v1173 = vpack.c.bf16 %v1134, %v1121
    %v1174 = vpack.c.bf16 %v1135, %v1122
    %v1175 = vpack.c.bf16 %v1136, %v1123
    %v1176 = vpack.c.bf16 %v1137, %v1124
    %v1177 = vpack.c.bf16 %v1138, %v1125
    %v1178 = vpack.c.bf16 %v1139, %v1126
    %v1179 = vpack.c.bf16 %v1140, %v1127
    %v1180 = vpack.c.bf16 %v1141, %v1128
    %v1181 = vpack.c.bf16 %v1142, %v1129
    %v1182 = vpack.c.bf16 %v1143, %v1130
    %v1183 = vpack.c.bf16 %v1144, %v1131
    %v1184 = vpack.c.bf16 %v1145, %v1132
    %v1185 = vpack.c.bf16 %v1146, %v1133
    %v1186 = vpack.c.bf16 %v1160, %v1147
    %v1187 = vpack.c.bf16 %v1161, %v1148
    %v1188 = vpack.c.bf16 %v1162, %v1149
    %v1189 = vpack.c.bf16 %v1163, %v1150
    %v1190 = vpack.c.bf16 %v1164, %v1151
    %v1191 = vpack.c.bf16 %v1165, %v1152
    %v1192 = vpack.c.bf16 %v1166, %v1153
    %v1193 = vpack.c.bf16 %v1167, %v1154
    %v1194 = vpack.c.bf16 %v1168, %v1155
    %v1195 = vpack.c.bf16 %v1169, %v1156
    %v1196 = vpack.c.bf16 %v1170, %v1157
    %v1197 = vpack.c.bf16 %v1171, %v1158
    %v1198 = vpack.c.bf16 %v1172, %v1159
    %v1225 = vunpack.c.l.b16 %v1173
    %v1226 = vunpack.c.l.b16 %v1174
    %v1227 = vunpack.c.l.b16 %v1175
    %v1228 = vunpack.c.l.b16 %v1176
    %v1229 = vunpack.c.l.b16 %v1177
    %v1230 = vunpack.c.l.b16 %v1178
    %v1231 = vunpack.c.l.b16 %v1179
    %v1232 = vunpack.c.l.b16 %v1180
    %v1233 = vunpack.c.l.b16 %v1181
    %v1234 = vunpack.c.l.b16 %v1182
    %v1235 = vunpack.c.l.b16 %v1183
    %v1236 = vunpack.c.l.b16 %v1184
    %v1237 = vunpack.c.l.b16 %v1185
    %v1238 = vunpack.c.h.b16 %v1173
    %v1239 = vunpack.c.h.b16 %v1174
    %v1240 = vunpack.c.h.b16 %v1175
    %v1241 = vunpack.c.h.b16 %v1176
    %v1242 = vunpack.c.h.b16 %v1177
    %v1243 = vunpack.c.h.b16 %v1178
    %v1244 = vunpack.c.h.b16 %v1179
    %v1245 = vunpack.c.h.b16 %v1180
    %v1246 = vunpack.c.h.b16 %v1181
    %v1247 = vunpack.c.h.b16 %v1182
    %v1248 = vunpack.c.h.b16 %v1183
    %v1249 = vunpack.c.h.b16 %v1184
    %v1250 = vunpack.c.h.b16 %v1185
    %v1251 = vunpack.c.l.b16 %v1186
    %v1252 = vunpack.c.l.b16 %v1187
    %v1253 = vunpack.c.l.b16 %v1188
    %v1254 = vunpack.c.l.b16 %v1189
    %v1255 = vunpack.c.l.b16 %v1190
    %v1256 = vunpack.c.l.b16 %v1191
    %v1257 = vunpack.c.l.b16 %v1192
    %v1258 = vunpack.c.l.b16 %v1193
    %v1259 = vunpack.c.l.b16 %v1194
    %v1260 = vunpack.c.l.b16 %v1195
    %v1261 = vunpack.c.l.b16 %v1196
    %v1262 = vunpack.c.l.b16 %v1197
    %v1263 = vunpack.c.l.b16 %v1198
    %v1264 = vunpack.c.h.b16 %v1186
    %v1265 = vunpack.c.h.b16 %v1187
    %v1266 = vunpack.c.h.b16 %v1188
    %v1267 = vunpack.c.h.b16 %v1189
    %v1268 = vunpack.c.h.b16 %v1190
    %v1269 = vunpack.c.h.b16 %v1191
    %v1270 = vunpack.c.h.b16 %v1192
    %v1271 = vunpack.c.h.b16 %v1193
    %v1272 = vunpack.c.h.b16 %v1194
    %v1273 = vunpack.c.h.b16 %v1195
    %v1274 = vunpack.c.h.b16 %v1196
    %v1275 = vunpack.c.h.b16 %v1197
    %v1276 = vunpack.c.h.b16 %v1198
    %v1277 = vpack.c.b16 %v1226, %v1225
    %v1278 = vpack.c.b16 %v1228, %v1227
    %v1279 = vpack.c.b16 %v1230, %v1229
    %v1280 = vpack.c.b16 %v1232, %v1231
    %v1281 = vpack.c.b16 %v1234, %v1233
    %v1282 = vpack.c.b16 %v1236, %v1235
    %v1283 = vpack.c.b16 %v1237, %v1237
    %v1284 = vpack.c.b16 %v1239, %v1238
    %v1285 = vpack.c.b16 %v1241, %v1240
    %v1286 = vpack.c.b16 %v1243, %v1242
    %v1287 = vpack.c.b16 %v1245, %v1244
    %v1288 = vpack.c.b16 %v1247, %v1246
    %v1289 = vpack.c.b16 %v1249, %v1248
    %v1290 = vpack.c.b16 %v1250, %v1250
    %v1291 = vpack.c.b16 %v1252, %v1251
    %v1292 = vpack.c.b16 %v1254, %v1253
    %v1293 = vpack.c.b16 %v1256, %v1255
    %v1294 = vpack.c.b16 %v1258, %v1257
    %v1295 = vpack.c.b16 %v1260, %v1259
    %v1296 = vpack.c.b16 %v1262, %v1261
    %v1297 = vpack.c.b16 %v1263, %v1263
    %v1298 = vpack.c.b16 %v1265, %v1264
    %v1299 = vpack.c.b16 %v1267, %v1266
    %v1300 = vpack.c.b16 %v1269, %v1268
    %v1301 = vpack.c.b16 %v1271, %v1270
    %v1302 = vpack.c.b16 %v1273, %v1272
    %v1303 = vpack.c.b16 %v1275, %v1274
    %v1304 = vpack.c.b16 %v1276, %v1276
    %1333 = vst [vmem:[%s3] sm:$0xff] %v1277
    %1334 = vst [vmem:[%s3 + $0x8] sm:$0xff] %v1278
    %1335 = vst [vmem:[%s3 + $0x10] sm:$0xff] %v1279
    %1336 = vst [vmem:[%s3 + $0x18] sm:$0xff] %v1280
    %1337 = vst [vmem:[%s3 + $0x20] sm:$0xff] %v1281
    %1338 = vst [vmem:[%s3 + $0x28] sm:$0xff] %v1282
    %1339 = vst [vmem:[%s3 + $0x30] sm:$0xf] %v1283
    %1340 = vst [vmem:[%s3 + $0x34] sm:$0xff] %v1284
    %1341 = vst [vmem:[%s3 + $0x3c] sm:$0xff] %v1285
    %1342 = vst [vmem:[%s3 + $0x44] sm:$0xff] %v1286
    %1343 = vst [vmem:[%s3 + $0x4c] sm:$0xff] %v1287
    %1344 = vst [vmem:[%s3 + $0x54] sm:$0xff] %v1288
    %1345 = vst [vmem:[%s3 + $0x5c] sm:$0xff] %v1289
    %1346 = vst [vmem:[%s3 + $0x64] sm:$0xf] %v1290
    %1347 = vst [vmem:[%s3 + $0x68] sm:$0xff] %v1291
    %1348 = vst [vmem:[%s3 + $0x70] sm:$0xff] %v1292
    %1349 = vst [vmem:[%s3 + $0x78] sm:$0xff] %v1293
    %1350 = vst [vmem:[%s3 + $0x80] sm:$0xff] %v1294
    %1351 = vst [vmem:[%s3 + $0x88] sm:$0xff] %v1295
    %1352 = vst [vmem:[%s3 + $0x90] sm:$0xff] %v1296
    %1353 = vst [vmem:[%s3 + $0x98] sm:$0xf] %v1297
    %1354 = vst [vmem:[%s3 + $0x9c] sm:$0xff] %v1298
    %1355 = vst [vmem:[%s3 + $0xa4] sm:$0xff] %v1299
    %1356 = vst [vmem:[%s3 + $0xac] sm:$0xff] %v1300
    %1357 = vst [vmem:[%s3 + $0xb4] sm:$0xff] %v1301
    %1358 = vst [vmem:[%s3 + $0xbc] sm:$0xff] %v1302
    %1359 = vst [vmem:[%s3 + $0xc4] sm:$0xff] %v1303
    %1360 = vst [vmem:[%s3 + $0xcc] sm:$0xf] %v1304
    // Predicated region
    $region18: #{unit_gcn_forward.1} parent=1 // pred_check
      _
    $region19: #{unit_gcn_forward.1} parent=1 // pred_check_branch
      %1362 = sbr.rel (0) target = $region21
    $region20: #{unit_gcn_forward.1} parent=1 // pred_region
      _
    $region21: #{unit_gcn_forward.1} parent=1 // pred_fallthru
      _
    // Predicated region
    $region22: #{unit_gcn_forward.1} parent=1 // pred_check
      _
    $region23: #{unit_gcn_forward.1} parent=1 // pred_check_branch
      %1364 = sbr.rel (0) target = $region25
    $region24: #{unit_gcn_forward.1} parent=1 // pred_region
      _
    $region25: #{unit_gcn_forward.1} parent=1 // pred_fallthru
      _
    %1365 = vsyncpa [#allocation3], 1

</llo_original>
